<compile_context>
chip_gen: v7x
topology: tpu7x:2x2x1
jax: 0.10.0
libtpu: 0.0.40
codegen_flags: <defaults>
</compile_context>

<pallas_src>
import functools
import math

import jax
import jax.numpy as jnp
from jax.experimental import pallas as pl
from jax.experimental.pallas import tpu as pltpu

_SUBLANE = 8                      # f32 sublane granule
_VMEM_CAP_FALLBACK = 64 << 20     # smallest per-TC VMEM across supported gens (v7x)


def _round_up(x, m):
    return (x + m - 1) // m * m


def _sublane_granule(dtype):
    # Packed sub-32-bit dtypes fill sublanes in pairs/quads:
    # f32 -> 8 rows, bf16 -> 16, int8/fp8 -> 32.
    return _SUBLANE * max(1, 4 // jnp.dtype(dtype).itemsize)


def _vmem_cap_bytes():
    """~85% of physical per-core VMEM (v5e/v6e: 128 MiB, v7x: 64 MiB)."""
    try:
        info = pltpu.get_tpu_info()
        cap = getattr(info, "vmem_capacity_bytes", None)
        if cap:
            return int(0.85 * int(cap))
    except Exception:
        pass
    return int(0.85 * _VMEM_CAP_FALLBACK)


def _mlp_kernel(x_ref, w1_ref, b1_ref, w2_ref, b2_ref, o_ref):
    cd = w1_ref.dtype
    # Cast x to the MXU dtype *inside* the kernel: reading f32 x costs 4 B/elem
    # of HBM vs. 8 B/elem for a wrapper-side cast (read f32 + write bf16 +
    # re-read bf16); the VPU cast hides under the DMA.
    x = x_ref[...].astype(cd)
    h = jnp.dot(x, w1_ref[...], preferred_element_type=jnp.float32)
    h = jnp.maximum(h + b1_ref[...], 0.0)                 # bias + ReLU in f32 (VPU)
    out = jnp.dot(h.astype(cd), w2_ref[...], preferred_element_type=jnp.float32)
    o_ref[...] = (out + b2_ref[...]).astype(o_ref.dtype)


def prepare_params(w1, b1, w2, b2, compute_dtype=jnp.bfloat16):
    """One-time parameter prep (hoisted out of the per-call hot path).

    Weights are stored transposed vs. nn.Linear (i.e. (in, out)) and cast once
    to the MXU compute dtype; biases stay f32 (bias-add runs on the VPU in f32,
    v5e-safe).  bf16 is recommended on every generation -- v5e's f32 MXU is a
    multi-pass path >3x slower.  Pass compute_dtype=jnp.float32 for bit-faithful
    f32 parity with the PyTorch module.
    """
    cd = jnp.dtype(compute_dtype)
    return (jnp.asarray(w1, cd),
            jnp.asarray(b1, jnp.float32).reshape(1, -1),
            jnp.asarray(w2, cd),
            jnp.asarray(b2, jnp.float32).reshape(1, -1))


@functools.partial(jax.jit,
                   static_argnames=("out_dtype", "row_tile", "weight_buffers"))
def linear_iter_forward(x, w1, b1, w2, b2, *, out_dtype=None,
                        row_tile=2048, weight_buffers=2):
    """Pallas implementation of LinearIter.forward.

    x : (..., in_dim); w1: (in_dim, out_dim); w2: (out_dim, out_dim); b*: (out_dim,)
    The MXU compute dtype is w1.dtype (use prepare_params).  out_dtype defaults
    to x.dtype (f32 parity); pass jnp.bfloat16 to halve output writeback.
    weight_buffers=1 single-buffers the resident weights (v7x + large out_dim).
    Returns squeeze of (1, ..., out_dim) -- matches PyTorch's .squeeze().
    """
    in_dim, out_dim = w1.shape
    lead_shape = x.shape[:-1]
    n = math.prod(lead_shape) if lead_shape else 1
    x2 = x.reshape(n, in_dim)

    cd = jnp.dtype(w1.dtype)
    odt = jnp.dtype(out_dtype) if out_dtype is not None else jnp.dtype(x.dtype)
    b1 = b1.reshape(1, out_dim).astype(jnp.float32)
    b2 = b2.reshape(1, out_dim).astype(jnp.float32)
    x_item = jnp.dtype(x.dtype).itemsize
    o_item = odt.itemsize

    # Row tile: large (amortize ~0.35us/step overhead), rounded to the sublane
    # packing granule of every row-tiled operand.
    gran = max(_sublane_granule(d) for d in (x.dtype, cd, odt))
    tm = min(int(row_tile), _round_up(n, gran))
    tm = max(gran, _round_up(tm, gran))
    # v7x megacore: keep >= 4 grid steps (floor ~256 rows) so the "parallel" row
    # axis can feed both TensorCores; harmless on single-TC v5e/v6e.
    while tm >= 512 and pl.cdiv(n, tm) < 4:
        tm = _round_up(tm // 2, gran)

    # VMEM budget: double-buffered x/out tiles + resident weights/biases +
    # f32 intermediates.  Shrink tm if it would exceed ~85% of physical VMEM.
    w_bytes = (in_dim + out_dim) * out_dim * cd.itemsize + 2 * out_dim * 4

    def needed_vmem(t):
        return (2 * t * (in_dim * x_item + out_dim * o_item)
                + weight_buffers * w_bytes
                + 6 * t * out_dim * 4)

    cap = _vmem_cap_bytes()
    while needed_vmem(tm) > cap and tm > gran:
        tm = max(gran, _round_up(tm // 2, gran))
    vmem_limit_bytes = int(min(cap, max(32 << 20, 2 * needed_vmem(tm))))

    grid = (pl.cdiv(n, tm),)   # final partial row tile handled by Pallas masking

    cost = pl.CostEstimate(
        flops=int(2 * n * (in_dim * out_dim + out_dim * out_dim)),
        transcendentals=0,
        bytes_accessed=int(n * in_dim * x_item + w_bytes + n * out_dim * o_item))

    def w_spec(shape):
        # Constant index_map -> DMA'd once, VMEM-resident across the whole grid.
        if weight_buffers == 2:
            return pl.BlockSpec(shape, lambda i: (0, 0))
        return pl.BlockSpec(shape, lambda i: (0, 0),
                            pipeline_mode=pl.Buffered(weight_buffers))

    out2 = pl.pallas_call(
        _mlp_kernel,
        out_shape=jax.ShapeDtypeStruct((n, out_dim), odt),
        grid=grid,
        in_specs=[
            pl.BlockSpec((tm, in_dim), lambda i: (i, 0)),   # x rows: streamed
            w_spec((in_dim, out_dim)),                      # W1: VMEM-resident
            w_spec((1, out_dim)),                           # b1
            w_spec((out_dim, out_dim)),                     # W2: VMEM-resident
            w_spec((1, out_dim)),                           # b2
        ],
        out_specs=pl.BlockSpec((tm, out_dim), lambda i: (i, 0)),
        compiler_params=pltpu.CompilerParams(
            dimension_semantics=("parallel",),
            vmem_limit_bytes=vmem_limit_bytes),
        cost_estimate=cost,
    )(x2, w1, b1, w2, b2)

    # Restore leading dims, then emulate PyTorch's unsqueeze(0)....squeeze()
    # (removes ALL size-1 dims).  Metadata-only under jit.
    out = out2.reshape(lead_shape + (out_dim,))
    return jnp.squeeze(out[None, ...])


def init_params(key, in_dim, out_dim):
    """Deterministic nn.Linear-style init (uniform +/- 1/sqrt(fan_in))."""
    k1, k2, k3, k4 = jax.random.split(key, 4)
    bound1 = 1.0 / math.sqrt(in_dim)
    bound2 = 1.0 / math.sqrt(out_dim)
    w1 = jax.random.uniform(k1, (in_dim, out_dim), jnp.float32, -bound1, bound1)
    b1 = jax.random.uniform(k2, (out_dim,), jnp.float32, -bound1, bound1)
    w2 = jax.random.uniform(k3, (out_dim, out_dim), jnp.float32, -bound2, bound2)
    b2 = jax.random.uniform(k4, (out_dim,), jnp.float32, -bound2, bound2)
    return w1, b1, w2, b2


if __name__ == "__main__":
    key = jax.random.PRNGKey(0)
    kx, kp, kx2 = jax.random.split(key, 3)

    N, in_dim, out_dim = 8, 16, 32
    x = jax.random.normal(kx, (N, in_dim), jnp.float32)
    w1, b1, w2, b2 = init_params(kp, in_dim, out_dim)
    ref = jnp.maximum(x @ w1 + b1, 0.0) @ w2 + b2

    # 1) f32 MXU path: bit-faithful layout of the PyTorch module.
    p32 = prepare_params(w1, b1, w2, b2, compute_dtype=jnp.float32)
    out_f32 = jax.block_until_ready(linear_iter_forward(x, *p32))
    assert out_f32.shape == (N, out_dim)
    assert jnp.allclose(out_f32, ref, atol=1e-5, rtol=1e-5)

    # 2) bf16 MXU operands (recommended default; f32 accumulation).
    pbf = prepare_params(w1, b1, w2, b2)           # bf16 weights, prepared once
    out_bf = jax.block_until_ready(linear_iter_forward(x, *pbf))
    xb = x.astype(jnp.bfloat16).astype(jnp.float32)
    w1b = w1.astype(jnp.bfloat16).astype(jnp.float32)
    w2b = w2.astype(jnp.bfloat16).astype(jnp.float32)
    hb = jnp.maximum(xb @ w1b + b1, 0.0).astype(jnp.bfloat16).astype(jnp.float32)
    ref_bf = hb @ w2b + b2
    assert out_bf.shape == (N, out_dim)
    assert jnp.allclose(out_bf, ref_bf, atol=1e-3, rtol=1e-3)

    # 3) Multi-step grid with a partial (masked) final row tile, f32.
    N2 = 1000
    x_big = jax.random.normal(kx2, (N2, in_dim), jnp.float32)
    out_big = jax.block_until_ready(linear_iter_forward(x_big, *p32, row_tile=256))
    ref_big = jnp.maximum(x_big @ w1 + b1, 0.0) @ w2 + b2
    assert out_big.shape == (N2, out_dim)
    assert jnp.allclose(out_big, ref_big, atol=1e-4, rtol=1e-4)

    # 4) Leading dims + unsqueeze(0)....squeeze() semantics.
    x3 = x.reshape(2, 4, in_dim)
    out3 = jax.block_until_ready(linear_iter_forward(x3, *p32))
    assert out3.shape == (2, 4, out_dim)
    assert jnp.allclose(out3, ref.reshape(2, 4, out_dim), atol=1e-5, rtol=1e-5)

    # 5) bf16 output writeback option (v6e/v7x HBM saver).
    out_bf_o = jax.block_until_ready(
        linear_iter_forward(x, *pbf, out_dtype=jnp.bfloat16))
    assert out_bf_o.dtype == jnp.bfloat16
    assert jnp.allclose(out_bf_o.astype(jnp.float32), ref_bf, atol=2e-2, rtol=2e-2)

    print("KERNEL_OK")
</pallas_src>

<mosaic_0001>
module attributes {stable_mosaic.version = 11 : i64} {
  func.func @_mlp_kernel(%arg0: i32, %arg1: memref<8x16xf32, #tpu.memory_space<vmem>>, %arg2: memref<16x32xf32, #tpu.memory_space<vmem>>, %arg3: memref<1x32xf32, #tpu.memory_space<vmem>>, %arg4: memref<32x32xf32, #tpu.memory_space<vmem>>, %arg5: memref<1x32xf32, #tpu.memory_space<vmem>>, %arg6: memref<8x32xf32, #tpu.memory_space<vmem>>) attributes {dimension_semantics = [#tpu.dimension_semantics<parallel>], iteration_bounds = array<i64: 1>, scalar_prefetch = 0 : i64, scratch_operands = 0 : i64, tpu.core_type = #tpu.core_type<tc>, window_params = [{transform_indices = @transform_0, window_bounds = array<i64: 8, 16>}, {pipeline_mode = #tpu.pipeline_mode<synchronous>, transform_indices = @transform_1, window_bounds = array<i64: 16, 32>}, {pipeline_mode = #tpu.pipeline_mode<synchronous>, transform_indices = @transform_2, window_bounds = array<i64: 1, 32>}, {pipeline_mode = #tpu.pipeline_mode<synchronous>, transform_indices = @transform_3, window_bounds = array<i64: 32, 32>}, {pipeline_mode = #tpu.pipeline_mode<synchronous>, transform_indices = @transform_4, window_bounds = array<i64: 1, 32>}, {transform_indices = @transform_5, window_bounds = array<i64: 8, 32>}]} {
    %c0 = arith.constant 0 : index
    %c0_0 = arith.constant 0 : index
    %0 = vector.load %arg1[%c0, %c0_0] : memref<8x16xf32, #tpu.memory_space<vmem>>, vector<8x16xf32>
    %c0_1 = arith.constant 0 : index
    %c0_2 = arith.constant 0 : index
    %1 = vector.load %arg2[%c0_1, %c0_2] : memref<16x32xf32, #tpu.memory_space<vmem>>, vector<16x32xf32>
    %cst = arith.constant dense<0.000000e+00> : vector<8x32xf32>
    %2 = tpu.matmul %0, %1, %cst {dimension_numbers = #tpu.dot_dimension_numbers<[1], [0], [0], [1], [0, 0, 1, 1], [], []>} : vector<8x16xf32>, vector<16x32xf32>, vector<8x32xf32> -> vector<8x32xf32>
    %c0_3 = arith.constant 0 : index
    %c0_4 = arith.constant 0 : index
    %3 = vector.load %arg3[%c0_3, %c0_4] : memref<1x32xf32, #tpu.memory_space<vmem>>, vector<1x32xf32>
    %4 = vector.broadcast %3 : vector<1x32xf32> to vector<8x32xf32>
    %5 = arith.addf %2, %4 : vector<8x32xf32>
    %cst_5 = arith.constant 0.000000e+00 : f32
    %6 = vector.broadcast %cst_5 : f32 to vector<8x32xf32>
    %7 = arith.maximumf %5, %6 : vector<8x32xf32>
    %c0_6 = arith.constant 0 : index
    %c0_7 = arith.constant 0 : index
    %8 = vector.load %arg4[%c0_6, %c0_7] : memref<32x32xf32, #tpu.memory_space<vmem>>, vector<32x32xf32>
    %cst_8 = arith.constant dense<0.000000e+00> : vector<8x32xf32>
    %9 = tpu.matmul %7, %8, %cst_8 {dimension_numbers = #tpu.dot_dimension_numbers<[1], [0], [0], [1], [0, 0, 1, 1], [], []>} : vector<8x32xf32>, vector<32x32xf32>, vector<8x32xf32> -> vector<8x32xf32>
    %c0_9 = arith.constant 0 : index
    %c0_10 = arith.constant 0 : index
    %10 = vector.load %arg5[%c0_9, %c0_10] : memref<1x32xf32, #tpu.memory_space<vmem>>, vector<1x32xf32>
    %11 = vector.broadcast %10 : vector<1x32xf32> to vector<8x32xf32>
    %12 = arith.addf %9, %11 : vector<8x32xf32>
    %c0_11 = arith.constant 0 : index
    %c0_12 = arith.constant 0 : index
    %13 = vector.load %arg6[%c0_11, %c0_12] : memref<8x32xf32, #tpu.memory_space<vmem>>, vector<8x32xf32>
    tpu.vector_store %arg6[%c0_11, %c0_12], %12 {strides = array<i32>} : memref<8x32xf32, #tpu.memory_space<vmem>>, vector<8x32xf32>,
    return
  }
  func.func @transform_0(%arg0: i32) -> (i32, i32) {
    %c0_i32 = arith.constant 0 : i32
    %c0_i32_0 = arith.constant 0 : i32
    return %arg0, %c0_i32 : i32, i32
  }
  func.func @transform_1(%arg0: i32) -> (i32, i32) {
    %c0_i32 = arith.constant 0 : i32
    %c0_i32_0 = arith.constant 0 : i32
    %c0_i32_1 = arith.constant 0 : i32
    return %c0_i32, %c0_i32_0 : i32, i32
  }
  func.func @transform_2(%arg0: i32) -> (i32, i32) {
    %c0_i32 = arith.constant 0 : i32
    %c0_i32_0 = arith.constant 0 : i32
    %c0_i32_1 = arith.constant 0 : i32
    return %c0_i32, %c0_i32_0 : i32, i32
  }
  func.func @transform_3(%arg0: i32) -> (i32, i32) {
    %c0_i32 = arith.constant 0 : i32
    %c0_i32_0 = arith.constant 0 : i32
    %c0_i32_1 = arith.constant 0 : i32
    return %c0_i32, %c0_i32_0 : i32, i32
  }
  func.func @transform_4(%arg0: i32) -> (i32, i32) {
    %c0_i32 = arith.constant 0 : i32
    %c0_i32_0 = arith.constant 0 : i32
    %c0_i32_1 = arith.constant 0 : i32
    return %c0_i32, %c0_i32_0 : i32, i32
  }
  func.func @transform_5(%arg0: i32) -> (i32, i32) {
    %c0_i32 = arith.constant 0 : i32
    %c0_i32_0 = arith.constant 0 : i32
    return %arg0, %c0_i32 : i32, i32
  }
}

</mosaic_0001>

<llo_original>
// kernel: linear_iter_forward.1
$region0: #{linear_iter_forward.1}
  #allocation0 [shape = 'u32[]', space=smem, size = 0x4, offset = 0x4, fixed_abs, tag = 'smem constant byte address 0x4 - core index']
  #allocation1 [shape = 'u32[144,128]{1,0:T(1,128)}', space=vmem, size = 0x12000, scoped, tag = 'internal scratch']
  %s0 = inlined_call_operand.hbm [shape: f32[8,16], index: 0, kind: input, shape index: {}]
  %s1 = inlined_call_operand.hbm [shape: f32[16,32], index: 1, kind: input, shape index: {}]
  %s2 = inlined_call_operand.vmem [shape: f32[1,32], index: 2, kind: input, shape index: {}]
  %s3 = inlined_call_operand.hbm [shape: f32[32,32], index: 3, kind: input, shape index: {}]
  %s4 = inlined_call_operand.vmem [shape: f32[1,32], index: 4, kind: input, shape index: {}]
  %s5 = inlined_call_operand.hbm [shape: f32[8,32], index: 5, kind: output, shape index: {}]
  %s6 = sld [smem:[#allocation0]]
  $region42: #{linear_iter_forward.1} parent=0
    _
  %s8 = ssub.s32 1, %s6
  %s9 = scalar_select 0, %s8, %s6
  $region1: #{linear_iter_forward.1} parent=0
    #allocation2 [shape = 'u8[4096]{0}', space=vmem, size = 0x1000, scoped, tag = 'input window, operand 0, single buffered']
    #allocation3 [shape = 's32[1]{0}', space=sflag, size = 0x4, scoped, tag = 'scoped memory for linear_iter_forward.1']
    #allocation4 [shape = 's32[1]{0}', space=sflag, size = 0x4, scoped, tag = 'scoped memory for linear_iter_forward.1']
    #allocation5 [shape = 'u8[8192]{0}', space=vmem, size = 0x2000, scoped, tag = 'input window, operand 1, single buffered']
    #allocation6 [shape = 's32[1]{0}', space=sflag, size = 0x4, scoped, tag = 'scoped memory for linear_iter_forward.1']
    #allocation7 [shape = 'u8[16384]{0}', space=vmem, size = 0x4000, scoped, tag = 'input window, operand 3, single buffered']
    #allocation8 [shape = 'u8[4096]{0}', space=vmem, size = 0x1000, scoped, tag = 'output window, operand 0, single buffered']
    %10 = vsyncpa [#allocation3], 0
    %11 = vsyncpa [#allocation6], 0
    %12 = vsyncpa [#allocation4], 0
    // Predicated region
    $region2: #{linear_iter_forward.1} parent=1 // pred_check
      _
    $region3: #{linear_iter_forward.1} parent=1 // pred_check_branch
      %14 = sbr.rel (0) target = $region5
    $region4: #{linear_iter_forward.1} parent=1 // pred_region
      %s16 = ssub.s32 128, 128
      %17 = vsyncadd [#allocation3], %s16
      %s19 = sshll.u32 [#allocation2], 4
      %s20 = int_to_ptr.vmem [resolvable:$true] %s19
      %22 = dma.hbm_to_vmem [thread:$0]  %s0, 128, %s20, [#allocation3]
    $region5: #{linear_iter_forward.1} parent=1 // pred_fallthru
      _
    // Predicated region
    $region6: #{linear_iter_forward.1} parent=1 // pred_check
      _
    $region7: #{linear_iter_forward.1} parent=1 // pred_check_branch
      %24 = sbr.rel (0) target = $region9
    $region8: #{linear_iter_forward.1} parent=1 // pred_region
      %s26 = ssub.s32 256, 256
      %27 = vsyncadd [#allocation6], %s26
      %s28 = sshll.u32 [#allocation5], 4
      %s29 = int_to_ptr.vmem [resolvable:$true] %s28
      %34 = dma.hbm_to_vmem [thread:$0]  %s1, 256, %s29, [#allocation6], 128, 128, 8
    $region9: #{linear_iter_forward.1} parent=1 // pred_fallthru
      _
    // Predicated region
    $region10: #{linear_iter_forward.1} parent=1 // pred_check
      _
    $region11: #{linear_iter_forward.1} parent=1 // pred_check_branch
      %36 = sbr.rel (0) target = $region13
    $region12: #{linear_iter_forward.1} parent=1 // pred_region
      _
    $region13: #{linear_iter_forward.1} parent=1 // pred_fallthru
      _
    // Predicated region
    $region14: #{linear_iter_forward.1} parent=1 // pred_check
      _
    $region15: #{linear_iter_forward.1} parent=1 // pred_check_branch
      %38 = sbr.rel (0) target = $region17
    $region16: #{linear_iter_forward.1} parent=1 // pred_region
      %s40 = ssub.s32 512, 512
      %41 = vsyncadd [#allocation6], %s40
      %s42 = sshll.u32 [#allocation7], 4
      %s43 = int_to_ptr.vmem [resolvable:$true] %s42
      %48 = dma.hbm_to_vmem [thread:$0]  %s3, 512, %s43, [#allocation6], 128, 128, 8
    $region17: #{linear_iter_forward.1} parent=1 // pred_fallthru
      _
    // Predicated region
    $region18: #{linear_iter_forward.1} parent=1 // pred_check
      _
    $region19: #{linear_iter_forward.1} parent=1 // pred_check_branch
      %50 = sbr.rel (0) target = $region21
    $region20: #{linear_iter_forward.1} parent=1 // pred_region
      _
    $region21: #{linear_iter_forward.1} parent=1 // pred_fallthru
      _
    // Predicated region
    $region22: #{linear_iter_forward.1} parent=1 // pred_check
      _
    $region23: #{linear_iter_forward.1} parent=1 // pred_check_branch
      %52 = sbr.rel (0) target = $region25
    $region24: #{linear_iter_forward.1} parent=1 // pred_region
      %53 = dma.done [#allocation3], 128
    $region25: #{linear_iter_forward.1} parent=1 // pred_fallthru
      _
    // Predicated region
    $region26: #{linear_iter_forward.1} parent=1 // pred_check
      _
    $region27: #{linear_iter_forward.1} parent=1 // pred_check_branch
      %55 = sbr.rel (0) target = $region29
    $region28: #{linear_iter_forward.1} parent=1 // pred_region
      %56 = dma.done [#allocation6], 256
    $region29: #{linear_iter_forward.1} parent=1 // pred_fallthru
      _
    // Predicated region
    $region30: #{linear_iter_forward.1} parent=1 // pred_check
      _
    $region31: #{linear_iter_forward.1} parent=1 // pred_check_branch
      %58 = sbr.rel (0) target = $region33
    $region32: #{linear_iter_forward.1} parent=1 // pred_region
      %59 = dma.done [#allocation6], 512
    $region33: #{linear_iter_forward.1} parent=1 // pred_fallthru
      _
    %v60 = vld [vmem:[#allocation2] sm:$0xff]
    %v61 = vld [vmem:[#allocation5] sm:$0xff]
    %v62 = vld [vmem:[#allocation5 + $0x8] sm:$0xff]
    %v63 = vld [vmem:[%s2] sm:$0x1]
    %v65 = vlaneseq
    %v66 = vshrl.u32 %v65, 7
    %v67 = vsub.s32 0, %v66
    %v68 = vrot.slane %v63, %v67
    %vm70 = vcmask 130048
    %v72 = vsel %vm70, %v60, 0
    %74 = vmatprep.subr.mxu0 0.0
    %75 = vmatpush1.msra.mxu0 %v61
    %76 = vmatprep.subr.mxu0 0.0
    %77 = vmatpush1.msra.mxu0 %v62
    %78 = vmatprep.subr.mxu0 0.0
    %79 = vmatpush1.msra.mxu0 0.0
    %80 = vmatprep.subr.mxu0 0.0
    %81 = vmatpush1.msra.mxu0 0.0
    %82 = vmatprep.subr.mxu0 0.0
    %83 = vmatpush1.msra.mxu0 0.0
    %84 = vmatprep.subr.mxu0 0.0
    %85 = vmatpush1.msra.mxu0 0.0
    %86 = vmatprep.subr.mxu0 0.0
    %87 = vmatpush1.msra.mxu0 0.0
    %88 = vmatprep.subr.mxu0 0.0
    %89 = vmatpush1.msra.mxu0 0.0
    %90 = vmatprep.subr.mxu0 0.0
    %91 = vmatpush1.msra.mxu0 0.0
    %92 = vmatprep.subr.mxu0 0.0
    %93 = vmatpush1.msra.mxu0 0.0
    %94 = vmatprep.subr.mxu0 0.0
    %95 = vmatpush1.msra.mxu0 0.0
    %96 = vmatprep.subr.mxu0 0.0
    %97 = vmatpush1.msra.mxu0 0.0
    %98 = vmatprep.subr.mxu0 0.0
    %99 = vmatpush1.msra.mxu0 0.0
    %100 = vmatprep.subr.mxu0 0.0
    %101 = vmatpush1.msra.mxu0 0.0
    %102 = vmatprep.subr.mxu0 0.0
    %103 = vmatpush1.msra.mxu0 0.0
    %104 = vmatprep.subr.mxu0 0.0
    %105 = vmatpush1.msra.mxu0 0.0
    %106 = vmatprep.subr.mxu0 0.0
    %107 = vmatpush1.msra.mxu0 0.0
    %108 = vmatprep.subr.mxu0 0.0
    %109 = vmatpush1.msra.mxu0 0.0
    %110 = vmatprep.subr.mxu0 0.0
    %111 = vmatpush1.msra.mxu0 0.0
    %112 = vmatprep.subr.mxu0 0.0
    %113 = vmatpush1.msra.mxu0 0.0
    %114 = vmatprep.subr.mxu0 0.0
    %115 = vmatpush1.msra.mxu0 0.0
    %116 = vmatprep.subr.mxu0 0.0
    %117 = vmatpush1.msra.mxu0 0.0
    %118 = vmatprep.subr.mxu0 0.0
    %119 = vmatpush1.msra.mxu0 0.0
    %120 = vmatprep.subr.mxu0 0.0
    %121 = vmatpush1.msra.mxu0 0.0
    %122 = vmatprep.subr.mxu0 0.0
    %123 = vmatpush1.msra.mxu0 0.0
    %124 = vmatprep.subr.mxu0 0.0
    %125 = vmatpush1.msra.mxu0 0.0
    %126 = vmatprep.subr.mxu0 0.0
    %127 = vmatpush1.msra.mxu0 0.0
    %128 = vmatprep.subr.mxu0 0.0
    %129 = vmatpush1.msra.mxu0 0.0
    %130 = vmatprep.subr.mxu0 0.0
    %131 = vmatpush1.msra.mxu0 0.0
    %132 = vmatprep.subr.mxu0 0.0
    %133 = vmatpush1.msra.mxu0 0.0
    %134 = vmatprep.subr.mxu0 0.0
    %135 = vmatpush1.msra.mxu0 0.0
    %136 = vmatprep.subr.mxu0 0.0
    %137 = vmatpush1.msra.mxu0 0.0
    %138 = vmatprep.mubr.f32.mxu0 0.0
    %139 = vmatmul.mubr.f32.gmra.mrb[0].mxu0 %v72
    %v140 = vpop.f32.mrb[0].mxu0
    %v141 = vadd.f32 %v68, %v140
    %v142 = vpop.f32.mrb[0].mxu0
    %143 = vdwg.mxu0
    %v144 = vmax.f32 %v141, 0.0
    %v145 = vld [vmem:[#allocation7] sm:$0xff]
    %v146 = vld [vmem:[#allocation7 + $0x8] sm:$0xff]
    %v147 = vld [vmem:[#allocation7 + $0x10] sm:$0xff]
    %v148 = vld [vmem:[#allocation7 + $0x18] sm:$0xff]
    %v149 = vld [vmem:[%s4] sm:$0x1]
    %v151 = vlaneseq
    %v152 = vshrl.u32 %v151, 7
    %v153 = vsub.s32 0, %v152
    %v154 = vrot.slane %v149, %v153
    %vm156 = vcmask 261120
    %v158 = vsel %vm156, %v144, 0
    %160 = vmatprep.subr.mxu0 0.0
    %161 = vmatpush1.msra.mxu0 %v145
    %162 = vmatprep.subr.mxu0 0.0
    %163 = vmatpush1.msra.mxu0 %v146
    %164 = vmatprep.subr.mxu0 0.0
    %165 = vmatpush1.msra.mxu0 %v147
    %166 = vmatprep.subr.mxu0 0.0
    %167 = vmatpush1.msra.mxu0 %v148
    %168 = vmatprep.subr.mxu0 0.0
    %169 = vmatpush1.msra.mxu0 0.0
    %170 = vmatprep.subr.mxu0 0.0
    %171 = vmatpush1.msra.mxu0 0.0
    %172 = vmatprep.subr.mxu0 0.0
    %173 = vmatpush1.msra.mxu0 0.0
    %174 = vmatprep.subr.mxu0 0.0
    %175 = vmatpush1.msra.mxu0 0.0
    %176 = vmatprep.subr.mxu0 0.0
    %177 = vmatpush1.msra.mxu0 0.0
    %178 = vmatprep.subr.mxu0 0.0
    %179 = vmatpush1.msra.mxu0 0.0
    %180 = vmatprep.subr.mxu0 0.0
    %181 = vmatpush1.msra.mxu0 0.0
    %182 = vmatprep.subr.mxu0 0.0
    %183 = vmatpush1.msra.mxu0 0.0
    %184 = vmatprep.subr.mxu0 0.0
    %185 = vmatpush1.msra.mxu0 0.0
    %186 = vmatprep.subr.mxu0 0.0
    %187 = vmatpush1.msra.mxu0 0.0
    %188 = vmatprep.subr.mxu0 0.0
    %189 = vmatpush1.msra.mxu0 0.0
    %190 = vmatprep.subr.mxu0 0.0
    %191 = vmatpush1.msra.mxu0 0.0
    %192 = vmatprep.subr.mxu0 0.0
    %193 = vmatpush1.msra.mxu0 0.0
    %194 = vmatprep.subr.mxu0 0.0
    %195 = vmatpush1.msra.mxu0 0.0
    %196 = vmatprep.subr.mxu0 0.0
    %197 = vmatpush1.msra.mxu0 0.0
    %198 = vmatprep.subr.mxu0 0.0
    %199 = vmatpush1.msra.mxu0 0.0
    %200 = vmatprep.subr.mxu0 0.0
    %201 = vmatpush1.msra.mxu0 0.0
    %202 = vmatprep.subr.mxu0 0.0
    %203 = vmatpush1.msra.mxu0 0.0
    %204 = vmatprep.subr.mxu0 0.0
    %205 = vmatpush1.msra.mxu0 0.0
    %206 = vmatprep.subr.mxu0 0.0
    %207 = vmatpush1.msra.mxu0 0.0
    %208 = vmatprep.subr.mxu0 0.0
    %209 = vmatpush1.msra.mxu0 0.0
    %210 = vmatprep.subr.mxu0 0.0
    %211 = vmatpush1.msra.mxu0 0.0
    %212 = vmatprep.subr.mxu0 0.0
    %213 = vmatpush1.msra.mxu0 0.0
    %214 = vmatprep.subr.mxu0 0.0
    %215 = vmatpush1.msra.mxu0 0.0
    %216 = vmatprep.subr.mxu0 0.0
    %217 = vmatpush1.msra.mxu0 0.0
    %218 = vmatprep.subr.mxu0 0.0
    %219 = vmatpush1.msra.mxu0 0.0
    %220 = vmatprep.subr.mxu0 0.0
    %221 = vmatpush1.msra.mxu0 0.0
    %222 = vmatprep.subr.mxu0 0.0
    %223 = vmatpush1.msra.mxu0 0.0
    %224 = vmatprep.mubr.f32.mxu0 0.0
    %225 = vmatmul.mubr.f32.gmra.mrb[0].mxu0 %v158
    %v226 = vpop.f32.mrb[0].mxu0
    %v227 = vadd.f32 %v154, %v226
    %v228 = vpop.f32.mrb[0].mxu0
    %229 = vdwg.mxu0
    %230 = vst.msk [vmem:[#allocation8] sm:$0xff] %vm156, %v227
    // Predicated region
    $region34: #{linear_iter_forward.1} parent=1 // pred_check
      _
    $region35: #{linear_iter_forward.1} parent=1 // pred_check_branch
      %232 = sbr.rel (0) target = $region37
    $region36: #{linear_iter_forward.1} parent=1 // pred_region
      %s234 = ssub.s32 128, 128
      %235 = vsyncadd [#allocation4], %s234
      %s237 = sshll.u32 [#allocation8], 4
      %s238 = int_to_ptr.vmem [resolvable:$true] %s237
      %240 = dma.vmem_to_hbm [thread:$0]  %s238, 128, %s5, [#allocation4]
    $region37: #{linear_iter_forward.1} parent=1 // pred_fallthru
      _
    // Predicated region
    $region38: #{linear_iter_forward.1} parent=1 // pred_check
      _
    $region39: #{linear_iter_forward.1} parent=1 // pred_check_branch
      %242 = sbr.rel (0) target = $region41
    $region40: #{linear_iter_forward.1} parent=1 // pred_region
      %243 = dma.done [#allocation4], 128
    $region41: #{linear_iter_forward.1} parent=1 // pred_fallthru
      _
    %244 = vsyncpa [#allocation3], 1
    %245 = vsyncpa [#allocation6], 1
    %246 = vsyncpa [#allocation4], 1

</llo_original>
